<compile_context>
chip_gen: v7x
topology: tpu7x:2x2x1
jax: 0.10.0
libtpu: 0.0.40
codegen_flags: <defaults>
</compile_context>

<pallas_src>
import functools

import jax
import jax.numpy as jnp
from jax import lax
from jax.experimental import pallas as pl
from jax.experimental.pallas import tpu as pltpu


def _round_up(x, m):
    return (x + m - 1) // m * m


def _vmem_plan():
    """Pick a per-generation scoped-VMEM limit (review: <=~48 MiB on v7x, larger on v5e/v6e)."""
    try:
        cap = int(pltpu.get_tpu_info().vmem_capacity_bytes)
    except Exception:
        cap = 64 * 1024 * 1024          # conservative (v7x-like) fallback
    if cap >= 96 * 1024 * 1024:          # v5e / v6e: 128 MiB physical per TensorCore
        return 64 * 1024 * 1024
    return 48 * 1024 * 1024              # v7x: 64 MiB physical per TensorCore


def _brier_loss_kernel(*refs, batch_size, log_prob_weight, reduce_in_kernel):
    if log_prob_weight > 0.0:
        alpha_ref, ytrue_ref, logprob_ref, out_ref = refs
    else:
        alpha_ref, ytrue_ref, out_ref = refs
        logprob_ref = None

    k, tb = alpha_ref.shape

    # Native-dtype HBM->VMEM DMA; upcast only after the load.
    alpha = alpha_ref[...].astype(jnp.float32)                       # (K, TB)

    # K sits on the (cheap) sublane axis: these are ceil(K/8)-sublane reduces.
    a0 = jnp.sum(alpha, axis=0, keepdims=True)                       # (1, TB)
    s2 = jnp.sum(alpha * alpha, axis=0, keepdims=True)               # (1, TB)

    # torch.gather(alpha, -1, y_true): one-hot select over the sublane axis.
    cls = lax.broadcasted_iota(jnp.int32, (k, tb), dimension=0)
    onehot = cls == ytrue_ref[...]                                   # (1,TB) -> (K,TB)
    a_true = jnp.sum(jnp.where(onehot, alpha, 0.0), axis=0, keepdims=True)

    # brier = 1 - 2*a_true/a0 + (s2 + a0)/(a0*(a0+1))
    #       = 1 + (s2 + a0 - 2*a_true*(a0+1)) * r,  r = 1/(a0*(a0+1))   (exact)
    r = 1.0 / (a0 * (a0 + 1.0))
    loss = 1.0 + (s2 + a0 - 2.0 * a_true * (a0 + 1.0)) * r           # (1, TB)

    if log_prob_weight > 0.0:
        loss = loss - log_prob_weight * logprob_ref[...].astype(jnp.float32)

    if not reduce_in_kernel:
        out_ref[...] = loss                                          # lane-dense store
        return

    # Mask padded tail columns (benign alpha=1.0 pads -> finite, just exclude them).
    if batch_size % tb != 0:
        col = (pl.program_id(0) * tb
               + lax.broadcasted_iota(jnp.int32, (1, tb), dimension=1))
        loss = jnp.where(col < batch_size, loss, 0.0)

    # Per-lane partial sums: fold lanes with vreg-aligned slices while the lane
    # count stays even; any odd remainder falls back to a single cross-lane
    # reduce (one XLU op per tile).  Wrapper finishes the tiny (grid, 128) sum.
    part, w = loss, tb
    while w > 128 and (w // 128) % 2 == 0:
        w //= 2
        part = part[:, :w] + part[:, w:]
    if w > 128:
        lane = lax.broadcasted_iota(jnp.int32, (1, 128), dimension=1)
        part = jnp.where(lane == 0, jnp.sum(part), 0.0)
    out_ref[...] = part                                              # (1, 128)


def _dirichlet_entropy(alpha):
    # TODO(synk): lgamma/digamma are computed in plain XLA (outside the Pallas
    # kernel); Mosaic lowering of these transcendentals is not guaranteed on all
    # TPU generations and the default entropy_weight=0.0 never hits this path.
    a = alpha.astype(jnp.float32)
    a0 = a.sum(-1)
    k = a.shape[-1]
    return (jnp.sum(lax.lgamma(a), -1) - lax.lgamma(a0)
            + (a0 - float(k)) * lax.digamma(a0)
            - jnp.sum((a - 1.0) * lax.digamma(a), -1))


def brier_loss(alpha, y_true, log_prob=None, *,
               entropy_weight=0.0, log_prob_weight=0.0, reduction='mean',
               block_b=None):
    """Pallas implementation of BrierLoss.forward.

    alpha:    [B, K] Dirichlet concentrations (y_pred.alpha), any float dtype
    y_true:   [B]    int class indices
    log_prob: [B]    log-probabilities (only required if log_prob_weight > 0)
    block_b:  optional batch-tile override (lanes); default: auto-sized.
    """
    assert reduction in ('mean', 'sum', 'none')
    alpha = jnp.asarray(alpha)
    B, K = alpha.shape
    entropy_weight = float(entropy_weight)
    log_prob_weight = float(log_prob_weight)
    use_logprob = log_prob_weight > 0.0
    if use_logprob and log_prob is None:
        raise ValueError("log_prob required when log_prob_weight > 0")

    itemsize = jnp.dtype(alpha.dtype).itemsize
    vmem_limit = _vmem_plan()

    # ---- batch-tile sizing from *padded* VMEM bytes per lane-column ----------
    sub_native = max(8, 32 // itemsize)           # sublane granule: 8 f32, 16 bf16
    k_native = _round_up(K, sub_native)
    k_f32 = _round_up(K, 8)
    per_lane = 2 * k_native * itemsize            # alpha block, double-buffered
    per_lane += 2 * 32                            # y_true (1,tb) i32 (8-sublane pad), x2
    if use_logprob:
        per_lane += 2 * 32                        # log_prob (1,tb) f32, x2
    if reduction == 'none':
        per_lane += 2 * 32                        # lane-dense (1,tb) f32 output, x2
    per_lane += 5 * k_f32 * 4 + 256               # in-kernel f32 temporaries (estimate)

    budget = int(0.45 * vmem_limit)
    tb = budget // per_lane
    if block_b is not None:
        tb = int(block_b)
    b128 = _round_up(B, 128)
    tb = max(128, min(tb, b128))
    tb = (tb // 128) * 128

    # v7x megacore: keep >= 2 grid steps when the batch is big enough.
    if pl.cdiv(B, tb) == 1 and b128 >= 256:
        tb = _round_up(pl.cdiv(B, 2), 128)

    # Rebalance tiles (equal work per step, minimal tail padding).
    grid_b = pl.cdiv(B, tb)
    tb = _round_up(pl.cdiv(B, grid_b), 128)
    grid_b = pl.cdiv(B, tb)
    b_pad = grid_b * tb
    pad = b_pad - B

    # ---- lane-dense operands: [K, B] alpha, [1, B] y_true / log_prob ---------
    alpha_t = jnp.transpose(alpha)                                   # [K, B], native dtype
    y2 = jnp.asarray(y_true).astype(jnp.int32).reshape(1, B)
    if pad:
        alpha_t = jnp.pad(alpha_t, ((0, 0), (0, pad)), constant_values=1)  # benign pad
        y2 = jnp.pad(y2, ((0, 0), (0, pad)))

    operands = [alpha_t, y2]
    in_specs = [
        pl.BlockSpec((K, tb), lambda i: (0, i)),
        pl.BlockSpec((1, tb), lambda i: (0, i)),
    ]
    if use_logprob:
        lp = jnp.asarray(log_prob).astype(jnp.float32).reshape(1, B)
        if pad:
            lp = jnp.pad(lp, ((0, 0), (0, pad)))
        operands.append(lp)
        in_specs.append(pl.BlockSpec((1, tb), lambda i: (0, i)))

    reduce_in_kernel = reduction != 'none'
    if reduce_in_kernel:
        out_shape = jax.ShapeDtypeStruct((1, grid_b * 128), jnp.float32)
        out_specs = pl.BlockSpec((1, 128), lambda i: (0, i))
    else:
        out_shape = jax.ShapeDtypeStruct((1, b_pad), jnp.float32)
        out_specs = pl.BlockSpec((1, tb), lambda i: (0, i))

    kernel = functools.partial(
        _brier_loss_kernel,
        batch_size=B,
        log_prob_weight=log_prob_weight if use_logprob else 0.0,
        reduce_in_kernel=reduce_in_kernel,
    )

    out = pl.pallas_call(
        kernel,
        out_shape=out_shape,
        grid=(grid_b,),
        in_specs=in_specs,
        out_specs=out_specs,
        compiler_params=pltpu.CompilerParams(
            dimension_semantics=("parallel",),
            vmem_limit_bytes=vmem_limit,
        ),
    )(*operands)

    if reduce_in_kernel:
        total = jnp.sum(out)
        if entropy_weight != 0.0:
            total = total - entropy_weight * jnp.sum(_dirichlet_entropy(alpha))
        if reduction == 'mean':
            return total / B
        return total
    loss = out[0, :B]
    if entropy_weight != 0.0:
        loss = loss - entropy_weight * _dirichlet_entropy(alpha)
    return loss


def _reference(alpha, y_true, log_prob, entropy_weight, log_prob_weight, reduction):
    """Pure-JAX reference mirroring the PyTorch forward."""
    alpha = alpha.astype(jnp.float32)
    a0 = alpha.sum(-1)
    a_true = jnp.take_along_axis(
        alpha, y_true[:, None].astype(jnp.int32), axis=-1)[:, 0]
    if log_prob_weight > 0:
        lp = -log_prob_weight * log_prob
    else:
        lp = jnp.zeros_like(a0)
    ses = jnp.sum(alpha * (alpha + 1.0), -1) / (a0 * (a0 + 1.0))
    loss = 1.0 - 2.0 * (a_true / a0) + ses + lp
    if entropy_weight != 0.0:
        loss = loss - entropy_weight * _dirichlet_entropy(alpha)
    if reduction == 'mean':
        return loss.mean()
    if reduction == 'sum':
        return loss.sum()
    return loss


if __name__ == "__main__":
    key = jax.random.PRNGKey(0)
    k1, k2, k3 = jax.random.split(key, 3)

    # Small classification-style shapes (e.g. 10 classes).
    B, K = 32, 10
    alpha = jnp.exp(jax.random.normal(k1, (B, K), dtype=jnp.float32)) + 1.0
    y_true = jax.random.randint(k2, (B,), 0, K, dtype=jnp.int32)
    log_prob = jax.random.normal(k3, (B,), dtype=jnp.float32)

    # 1) mean reduction + log_prob regularizer (f32 alpha)
    out = jax.block_until_ready(
        brier_loss(alpha, y_true, log_prob, log_prob_weight=0.5, reduction='mean'))
    ref = _reference(alpha, y_true, log_prob, 0.0, 0.5, 'mean')
    assert jnp.allclose(out, ref, rtol=1e-5, atol=1e-5), (out, ref)

    # 2) 'none' reduction (default module config: both weights zero)
    out_n = jax.block_until_ready(brier_loss(alpha, y_true, log_prob, reduction='none'))
    ref_n = _reference(alpha, y_true, log_prob, 0.0, 0.0, 'none')
    assert out_n.shape == (B,)
    assert jnp.allclose(out_n, ref_n, rtol=1e-5, atol=1e-5)

    # 3) 'sum' reduction with the entropy regularizer (entropy done in XLA)
    out_s = jax.block_until_ready(
        brier_loss(alpha, y_true, log_prob, entropy_weight=0.1, reduction='sum'))
    ref_s = _reference(alpha, y_true, log_prob, 0.1, 0.0, 'sum')
    assert jnp.allclose(out_s, ref_s, rtol=1e-5, atol=1e-5), (out_s, ref_s)

    # 4) bf16 alpha through HBM, multi-tile grid with ragged tail + lane-fold path
    B2 = 600
    k4, k5, k6 = jax.random.split(jax.random.PRNGKey(1), 3)
    alpha_bf = (jnp.exp(jax.random.normal(k4, (B2, K), jnp.float32)) + 1.0
                ).astype(jnp.bfloat16)
    y2 = jax.random.randint(k5, (B2,), 0, K, dtype=jnp.int32)
    lp2 = jax.random.normal(k6, (B2,), dtype=jnp.float32)
    out_bf = jax.block_until_ready(
        brier_loss(alpha_bf, y2, lp2, log_prob_weight=0.25, reduction='mean',
                   block_b=256))
    ref_bf = _reference(alpha_bf, y2, lp2, 0.0, 0.25, 'mean')
    assert jnp.allclose(out_bf, ref_bf, rtol=1e-4, atol=1e-4), (out_bf, ref_bf)

    out_bfn = jax.block_until_ready(
        brier_loss(alpha_bf, y2, lp2, reduction='none', block_b=256))
    ref_bfn = _reference(alpha_bf, y2, lp2, 0.0, 0.0, 'none')
    assert out_bfn.shape == (B2,)
    assert jnp.allclose(out_bfn, ref_bfn, rtol=1e-4, atol=1e-4)

    # 5) auto-sized tiles (no block_b override) on the same ragged bf16 batch
    out_auto = jax.block_until_ready(
        brier_loss(alpha_bf, y2, lp2, log_prob_weight=0.25, reduction='sum'))
    ref_auto = _reference(alpha_bf, y2, lp2, 0.0, 0.25, 'sum')
    assert jnp.allclose(out_auto, ref_auto, rtol=1e-4, atol=1e-4), (out_auto, ref_auto)

    print("KERNEL_OK")
</pallas_src>

<mosaic_0001>
module attributes {stable_mosaic.version = 11 : i64} {
  func.func @_brier_loss_kernel(%arg0: i32, %arg1: memref<10x128xf32, #tpu.memory_space<vmem>>, %arg2: memref<1x128xi32, #tpu.memory_space<vmem>>, %arg3: memref<1x128xf32, #tpu.memory_space<vmem>>, %arg4: memref<1x128xf32, #tpu.memory_space<vmem>>) attributes {dimension_semantics = [#tpu.dimension_semantics<parallel>], iteration_bounds = array<i64: 1>, scalar_prefetch = 0 : i64, scratch_operands = 0 : i64, tpu.core_type = #tpu.core_type<tc>, window_params = [{transform_indices = @transform_0, window_bounds = array<i64: 10, 128>}, {transform_indices = @transform_1, window_bounds = array<i64: 1, 128>}, {transform_indices = @transform_2, window_bounds = array<i64: 1, 128>}, {transform_indices = @transform_3, window_bounds = array<i64: 1, 128>}]} {
    %c0 = arith.constant 0 : index
    %c0_0 = arith.constant 0 : index
    %0 = vector.load %arg1[%c0, %c0_0] : memref<10x128xf32, #tpu.memory_space<vmem>>, vector<10x128xf32>
    %cst = arith.constant dense<0.000000e+00> : vector<128xf32>
    %1 = vector.multi_reduction <add>, %0, %cst [0] : vector<10x128xf32> to vector<128xf32>
    %2 = vector.shape_cast %1 : vector<128xf32> to vector<1x128xf32>
    %3 = arith.mulf %0, %0 : vector<10x128xf32>
    %cst_1 = arith.constant dense<0.000000e+00> : vector<128xf32>
    %4 = vector.multi_reduction <add>, %3, %cst_1 [0] : vector<10x128xf32> to vector<128xf32>
    %5 = vector.shape_cast %4 : vector<128xf32> to vector<1x128xf32>
    %6 = tpu.iota {dimensions = array<i32: 0>} : vector<10x128xi32>
    %c0_2 = arith.constant 0 : index
    %c0_3 = arith.constant 0 : index
    %7 = vector.load %arg2[%c0_2, %c0_3] : memref<1x128xi32, #tpu.memory_space<vmem>>, vector<1x128xi32>
    %8 = vector.broadcast %7 : vector<1x128xi32> to vector<10x128xi32>
    %9 = arith.cmpi eq, %6, %8 : vector<10x128xi32>
    %cst_4 = arith.constant 0.000000e+00 : f32
    %10 = vector.broadcast %cst_4 : f32 to vector<10x128xf32>
    %11 = arith.select %9, %0, %10 : vector<10x128xi1>, vector<10x128xf32>
    %cst_5 = arith.constant dense<0.000000e+00> : vector<128xf32>
    %12 = vector.multi_reduction <add>, %11, %cst_5 [0] : vector<10x128xf32> to vector<128xf32>
    %13 = vector.shape_cast %12 : vector<128xf32> to vector<1x128xf32>
    %cst_6 = arith.constant 1.000000e+00 : f32
    %14 = vector.broadcast %cst_6 : f32 to vector<1x128xf32>
    %15 = arith.addf %2, %14 : vector<1x128xf32>
    %16 = arith.mulf %2, %15 : vector<1x128xf32>
    %cst_7 = arith.constant 1.000000e+00 : f32
    %17 = vector.broadcast %cst_7 : f32 to vector<1x128xf32>
    %18 = arith.divf %17, %16 : vector<1x128xf32>
    %19 = arith.addf %5, %2 : vector<1x128xf32>
    %cst_8 = arith.constant 2.000000e+00 : f32
    %20 = vector.broadcast %cst_8 : f32 to vector<1x128xf32>
    %21 = arith.mulf %20, %13 : vector<1x128xf32>
    %cst_9 = arith.constant 1.000000e+00 : f32
    %22 = vector.broadcast %cst_9 : f32 to vector<1x128xf32>
    %23 = arith.addf %2, %22 : vector<1x128xf32>
    %24 = arith.mulf %21, %23 : vector<1x128xf32>
    %25 = arith.subf %19, %24 : vector<1x128xf32>
    %26 = arith.mulf %25, %18 : vector<1x128xf32>
    %cst_10 = arith.constant 1.000000e+00 : f32
    %27 = vector.broadcast %cst_10 : f32 to vector<1x128xf32>
    %28 = arith.addf %27, %26 : vector<1x128xf32>
    %c0_11 = arith.constant 0 : index
    %c0_12 = arith.constant 0 : index
    %29 = vector.load %arg3[%c0_11, %c0_12] : memref<1x128xf32, #tpu.memory_space<vmem>>, vector<1x128xf32>
    %cst_13 = arith.constant 5.000000e-01 : f32
    %30 = vector.broadcast %cst_13 : f32 to vector<1x128xf32>
    %31 = arith.mulf %30, %29 : vector<1x128xf32>
    %32 = arith.subf %28, %31 : vector<1x128xf32>
    %c128_i32 = arith.constant 128 : i32
    %33 = arith.muli %arg0, %c128_i32 : i32
    %34 = tpu.iota {dimensions = array<i32: 1>} : vector<1x128xi32>
    %35 = vector.broadcast %33 : i32 to vector<1x128xi32>
    %36 = arith.addi %35, %34 : vector<1x128xi32>
    %c32_i32 = arith.constant 32 : i32
    %37 = vector.broadcast %c32_i32 : i32 to vector<1x128xi32>
    %38 = arith.cmpi slt, %36, %37 : vector<1x128xi32>
    %cst_14 = arith.constant 0.000000e+00 : f32
    %39 = vector.broadcast %cst_14 : f32 to vector<1x128xf32>
    %40 = arith.select %38, %32, %39 : vector<1x128xi1>, vector<1x128xf32>
    %c0_15 = arith.constant 0 : index
    %c0_16 = arith.constant 0 : index
    %41 = vector.load %arg4[%c0_15, %c0_16] : memref<1x128xf32, #tpu.memory_space<vmem>>, vector<1x128xf32>
    tpu.vector_store %arg4[%c0_15, %c0_16], %40 {strides = array<i32>} : memref<1x128xf32, #tpu.memory_space<vmem>>, vector<1x128xf32>,
    return
  }
  func.func @transform_0(%arg0: i32) -> (i32, i32) {
    %c0_i32 = arith.constant 0 : i32
    %c0_i32_0 = arith.constant 0 : i32
    return %c0_i32, %arg0 : i32, i32
  }
  func.func @transform_1(%arg0: i32) -> (i32, i32) {
    %c0_i32 = arith.constant 0 : i32
    %c0_i32_0 = arith.constant 0 : i32
    return %c0_i32, %arg0 : i32, i32
  }
  func.func @transform_2(%arg0: i32) -> (i32, i32) {
    %c0_i32 = arith.constant 0 : i32
    %c0_i32_0 = arith.constant 0 : i32
    return %c0_i32, %arg0 : i32, i32
  }
  func.func @transform_3(%arg0: i32) -> (i32, i32) {
    %c0_i32 = arith.constant 0 : i32
    %c0_i32_0 = arith.constant 0 : i32
    return %c0_i32, %arg0 : i32, i32
  }
}

</mosaic_0001>

<llo_original>
// kernel: tpu_custom_call.1
$region0: #{tpu_custom_call.1}
  #allocation0 [shape = 'u32[]', space=smem, size = 0x4, offset = 0x4, fixed_abs, tag = 'smem constant byte address 0x4 - core index']
  #allocation1 [shape = 'u32[144,128]{1,0:T(1,128)}', space=vmem, size = 0x12000, scoped, tag = 'internal scratch']
  %s0 = inlined_call_operand.hbm [shape: f32[10,128], index: 0, kind: input, shape index: {}]
  %s1 = inlined_call_operand.vmem [shape: s32[1,128], index: 1, kind: input, shape index: {}]
  %s2 = inlined_call_operand.vmem [shape: f32[1,128], index: 2, kind: input, shape index: {}]
  %s3 = inlined_call_operand.hbm [shape: f32[1,128], index: 3, kind: output, shape index: {}]
  %s4 = sld [smem:[#allocation0]]
  $region26: #{tpu_custom_call.1} parent=0
    _
  %s6 = ssub.s32 1, %s4
  %s7 = scalar_select 0, %s6, %s4
  $region1: #{tpu_custom_call.1} parent=0
    #allocation2 [shape = 'u8[8192]{0}', space=vmem, size = 0x2000, scoped, tag = 'input window, operand 0, single buffered']
    #allocation3 [shape = 's32[1]{0}', space=sflag, size = 0x4, scoped, tag = 'scoped memory for tpu_custom_call.1']
    #allocation4 [shape = 's32[1]{0}', space=sflag, size = 0x4, scoped, tag = 'scoped memory for tpu_custom_call.1']
    #allocation5 [shape = 'u8[512]{0}', space=vmem, size = 0x400, scoped, tag = 'output window, operand 0, single buffered']
    %8 = vsyncpa [#allocation3], 0
    %9 = vsyncpa [#allocation4], 0
    // Predicated region
    $region2: #{tpu_custom_call.1} parent=1 // pred_check
      _
    $region3: #{tpu_custom_call.1} parent=1 // pred_check_branch
      %11 = sbr.rel (0) target = $region5
    $region4: #{tpu_custom_call.1} parent=1 // pred_region
      %s13 = ssub.s32 256, 256
      %14 = vsyncadd [#allocation3], %s13
      %s15 = sshll.u32 [#allocation2], 4
      %s16 = int_to_ptr.vmem [resolvable:$true] %s15
      %21 = dma.hbm_to_vmem [thread:$0]  %s0, 256, %s16, [#allocation3], 128, 128, 8
    $region5: #{tpu_custom_call.1} parent=1 // pred_fallthru
      _
    // Predicated region
    $region6: #{tpu_custom_call.1} parent=1 // pred_check
      _
    $region7: #{tpu_custom_call.1} parent=1 // pred_check_branch
      %23 = sbr.rel (0) target = $region9
    $region8: #{tpu_custom_call.1} parent=1 // pred_region
      _
    $region9: #{tpu_custom_call.1} parent=1 // pred_fallthru
      _
    // Predicated region
    $region10: #{tpu_custom_call.1} parent=1 // pred_check
      _
    $region11: #{tpu_custom_call.1} parent=1 // pred_check_branch
      %25 = sbr.rel (0) target = $region13
    $region12: #{tpu_custom_call.1} parent=1 // pred_region
      _
    $region13: #{tpu_custom_call.1} parent=1 // pred_fallthru
      _
    // Predicated region
    $region14: #{tpu_custom_call.1} parent=1 // pred_check
      _
    $region15: #{tpu_custom_call.1} parent=1 // pred_check_branch
      %27 = sbr.rel (0) target = $region17
    $region16: #{tpu_custom_call.1} parent=1 // pred_region
      %28 = dma.done [#allocation3], 256
    $region17: #{tpu_custom_call.1} parent=1 // pred_fallthru
      _
    %v29 = vld [vmem:[#allocation2] sm:$0xff]
    %v30 = vld [vmem:[#allocation2 + $0x8] sm:$0x3]
    %vm31 = vcmask 1041408
    %v32 = vsel %vm31, %v30, 0.0
    %v33 = vadd.f32 %v29, %v32
    %v34 = vrot.slane %v33, 4
    %v35 = vadd.f32 %v33, %v34
    %v36 = vrot.slane %v35, 2
    %v37 = vadd.f32 %v35, %v36
    %v38 = vrot.slane %v37, 1
    %v39 = vadd.f32 %v37, %v38
    %v40 = vmul.f32 %v29, %v29
    %v41 = vmul.f32 %v30, %v30
    %v42 = vsel %vm31, %v41, 0.0
    %v43 = vadd.f32 %v40, %v42
    %v44 = vrot.slane %v43, 4
    %v45 = vadd.f32 %v43, %v44
    %v46 = vrot.slane %v45, 2
    %v47 = vadd.f32 %v45, %v46
    %v48 = vrot.slane %v47, 1
    %v49 = vadd.f32 %v47, %v48
    %v50 = vlaneseq
    %v51 = vshrl.u32 %v50, 7
    %v52 = vadd.s32 %v51, 8
    %v53 = vld [vmem:[%s1] sm:$0x1]
    %v54 = vlaneseq
    %v55 = vshrl.u32 %v54, 7
    %v56 = vsub.s32 0, %v55
    %v57 = vrot.slane %v53, %v56
    %vm58 = vcmp.eq.s32.totalorder %v51, %v57
    %vm59 = vcmp.eq.s32.totalorder %v52, %v57
    %v60 = vsel %vm58, %v29, 0.0
    %v61 = vsel %vm59, %v30, 0.0
    %v62 = vsel %vm31, %v61, 0.0
    %v63 = vadd.f32 %v60, %v62
    %v64 = vrot.slane %v63, 4
    %v65 = vadd.f32 %v63, %v64
    %v66 = vrot.slane %v65, 2
    %v67 = vadd.f32 %v65, %v66
    %v68 = vrot.slane %v67, 1
    %v69 = vadd.f32 %v67, %v68
    %v70 = vadd.f32 %v39, 1.0
    %v71 = vmul.f32 %v39, %v70
    %v72 = vrcp.pop %v71
    %v73 = vmul.f32 1.0, %v72
    %v74 = vadd.f32 %v49, %v39
    %v75 = vmul.f32 %v69, 2.0
    %v76 = vmul.f32 %v75, %v70
    %v77 = vsub.f32 %v74, %v76
    %v78 = vmul.f32 %v77, %v73
    %v79 = vadd.f32 %v78, 1.0
    %v80 = vld [vmem:[%s2] sm:$0x1]
    %v81 = vmul.f32 %v80, 0.5
    %v82 = vsub.f32 %v79, %v81
    %s83 = smul.u32 0, 128
    %v84 = vlaneseq
    %v85 = vand.u32 %v84, 127
    %v86 = vstv %s83
    %v87 = vadd.s32 %v86, %v85
    %vm88 = vcmp.lt.s32.totalorder %v87, 32
    %v89 = vsel %vm88, %v82, 0.0
    %90 = vst [vmem:[#allocation5] sm:$0x1] %v89
    // Predicated region
    $region18: #{tpu_custom_call.1} parent=1 // pred_check
      _
    $region19: #{tpu_custom_call.1} parent=1 // pred_check_branch
      %92 = sbr.rel (0) target = $region21
    $region20: #{tpu_custom_call.1} parent=1 // pred_region
      %s94 = ssub.s32 16, 16
      %95 = vsyncadd [#allocation4], %s94
      %s97 = sshll.u32 [#allocation5], 4
      %s98 = int_to_ptr.vmem [resolvable:$true] %s97
      %100 = dma.vmem_to_hbm [thread:$0]  %s98, 16, %s3, [#allocation4]
    $region21: #{tpu_custom_call.1} parent=1 // pred_fallthru
      _
    // Predicated region
    $region22: #{tpu_custom_call.1} parent=1 // pred_check
      _
    $region23: #{tpu_custom_call.1} parent=1 // pred_check_branch
      %102 = sbr.rel (0) target = $region25
    $region24: #{tpu_custom_call.1} parent=1 // pred_region
      %103 = dma.done [#allocation4], 16
    $region25: #{tpu_custom_call.1} parent=1 // pred_fallthru
      _
    %104 = vsyncpa [#allocation3], 1
    %105 = vsyncpa [#allocation4], 1

</llo_original>
